<compile_context>
chip_gen: v5e
topology: v5e:2x2
jax: 0.10.0
libtpu: 0.0.40
codegen_flags: <defaults>
</compile_context>

<pallas_src>
import functools
import math

import numpy as np
import jax
import jax.numpy as jnp
from jax.experimental import pallas as pl
from jax.experimental.pallas import tpu as pltpu


def _round_up(x: int, m: int) -> int:
    return ((x + m - 1) // m) * m


def _cdiv(a: int, b: int) -> int:
    return (a + b - 1) // b


# ----------------------------------------------------------------------------
# Pallas kernel: fused exponent, lane-dense (K, tile_n) output.
# ----------------------------------------------------------------------------
def _gaussian_rbf_kernel(r_ref, out_ref, *, num_basis, sqrt_width, center_step,
                         cutoff, compute_dtype):
    """out[k, n] = exp(base(r[n]) - (sqrt(w)*r[n] - sqrt(w)*center[k])^2).

    r_ref:   (1, tile_n)  float32, distances on the lane axis.
    out_ref: (K, tile_n)  out_dtype, basis index on sublanes, distances on lanes.
    """
    r = r_ref[...]                                          # (1, tile_n) f32
    c = jnp.float32(cutoff)

    # log of the bump cutoff, computed once per distance (cheap, row-sized):
    #   base = -r^2 / ((c - r)(c + r))  for r < c,  else large-negative (-> exp = 0)
    inside = r < c
    r_safe = jnp.where(inside, r, jnp.zeros_like(r))        # avoid 0/0 in dead branch
    base = jnp.where(
        inside,
        -(r_safe * r_safe) / ((c - r_safe) * (c + r_safe)),
        jnp.full_like(r, -1e30),
    )                                                       # (1, tile_n)

    # Pre-scaled distance (row-sized): u = sqrt(width) * r.
    u = r * jnp.float32(sqrt_width)                         # (1, tile_n)

    # Scaled centers sqrt(width)*center_k generated in-kernel (no DMA, no operand).
    uc = (
        jax.lax.broadcasted_iota(jnp.int32, (num_basis, 1), 0).astype(jnp.float32)
        * jnp.float32(sqrt_width * center_step)
    )                                                       # (K, 1)

    cd = compute_dtype
    d = u.astype(cd) - uc.astype(cd)                        # (K, tile_n)
    out_ref[...] = jnp.exp(base.astype(cd) - d * d).astype(out_ref.dtype)


# ----------------------------------------------------------------------------
# Wrapper (mirrors GaussianRadialBasisFunctions.forward)
# ----------------------------------------------------------------------------
def gaussian_rbf(r, num_basis_functions: int, cutoff: float,
                 *, tile_n: int = 32768, lane_major: bool = False,
                 out_dtype=jnp.float32, compute_dtype=jnp.float32):
    """Compute Gaussian radial basis functions for distances `r`.

    r: (N,) or (N, 1) distances.
    Returns (N, K) in `out_dtype` by default (same layout as the PyTorch module).
    lane_major=True returns the kernel-native lane-dense (K, N) layout (no
    transpose pass) for bandwidth-critical downstream consumers.
    out_dtype / compute_dtype can be set to jnp.bfloat16 on v6e/v7x to halve
    HBM write traffic / use the 2x-rate bf16 VPU+EUP paths (lower precision).
    """
    r = jnp.asarray(r, jnp.float32)
    if r.ndim == 2 and r.shape[-1] == 1:
        r_flat = r[:, 0]
    else:
        r_flat = r.reshape(-1)

    N = int(r_flat.shape[0])
    K = int(num_basis_functions)
    cutoff = float(cutoff)
    width = float(num_basis_functions) / cutoff
    sqrt_width = math.sqrt(width)
    center_step = cutoff / (K - 1) if K > 1 else 0.0

    # ---- tile / grid selection -------------------------------------------
    # Lane-dense multiples of 128; guarantee >= 2 grid steps whenever N > 128
    # so the "parallel" axis can shard across v7x's two TensorCores, and keep
    # padding waste bounded (< steps * 128 elements) for any N.
    tile_n = max(128, _round_up(int(tile_n), 128))
    n_pad128 = _round_up(max(N, 1), 128)
    if n_pad128 <= 128:
        steps = 1
    else:
        steps = max(2, _cdiv(n_pad128, tile_n))
    tile = _round_up(_cdiv(n_pad128, steps), 128)
    n_pad = steps * tile

    r_row = r_flat.reshape(1, N)
    if n_pad != N:
        # Pad with `cutoff` so the cutoff factor is exactly 0 in the tail
        # (padded outputs are sliced off below).
        r_row = jnp.pad(r_row, ((0, 0), (0, n_pad - N)), constant_values=cutoff)

    kernel = functools.partial(
        _gaussian_rbf_kernel,
        num_basis=K,
        sqrt_width=sqrt_width,
        center_step=center_step,
        cutoff=cutoff,
        compute_dtype=compute_dtype,
    )

    out_kn = pl.pallas_call(
        kernel,
        out_shape=jax.ShapeDtypeStruct((K, n_pad), out_dtype),
        grid_spec=pltpu.PrefetchScalarGridSpec(
            num_scalar_prefetch=0,
            grid=(steps,),
            in_specs=[pl.BlockSpec((1, tile), lambda i: (0, i))],   # r, lane-dense
            out_specs=pl.BlockSpec((K, tile), lambda i: (0, i)),    # lane-dense out
        ),
        compiler_params=pltpu.CompilerParams(
            dimension_semantics=("parallel",),
            vmem_limit_bytes=32 * 1024 * 1024,
        ),
    )(r_row)

    if lane_major:
        # Kernel-native (K, N); avoid the slice copy entirely when no padding.
        return out_kn if n_pad == N else out_kn[:, :N]
    # Default: match the PyTorch module's (N, K) broadcast output.
    return out_kn[:, :N].T


# ----------------------------------------------------------------------------
# Pure-JAX reference (same math as the PyTorch forward, float32).
# ----------------------------------------------------------------------------
def _reference(r, num_basis_functions, cutoff):
    r = jnp.asarray(r, jnp.float32).reshape(-1, 1)
    center = jnp.linspace(0.0, cutoff, num_basis_functions, dtype=jnp.float32)
    width = jnp.float32(num_basis_functions / cutoff)
    c = jnp.float32(cutoff)
    inside = r < c
    r_safe = jnp.where(inside, r, 0.0)
    fc = jnp.where(inside, jnp.exp(-(r_safe ** 2) / ((c - r_safe) * (c + r_safe))), 0.0)
    return fc * jnp.exp(-width * (r - center) ** 2)


if __name__ == "__main__":
    num_basis_functions = 16
    cutoff = 5.0
    N = 200  # deliberately NOT a multiple of 128 -> padded tail + 2-step grid

    key = jax.random.PRNGKey(0)
    # distances in [0, 6): includes values beyond the cutoff (fc == 0 branch)
    r = jax.random.uniform(key, (N, 1), dtype=jnp.float32, minval=0.0, maxval=6.0)
    r = r.at[0, 0].set(0.0)      # exact zero distance
    r = r.at[1, 0].set(cutoff)   # exactly at the cutoff

    ref = np.asarray(_reference(r, num_basis_functions, cutoff))

    # Default f32 path, (N, K) output (module semantics).
    out = jax.block_until_ready(gaussian_rbf(r, num_basis_functions, cutoff))
    assert out.shape == (N, num_basis_functions)
    assert out.dtype == jnp.float32
    assert not np.any(np.isnan(np.asarray(out)))
    np.testing.assert_allclose(np.asarray(out), ref, rtol=1e-4, atol=1e-5)

    # Kernel-native lane-major (K, N) fast path (no transpose pass).
    out_kn = jax.block_until_ready(
        gaussian_rbf(r, num_basis_functions, cutoff, lane_major=True))
    assert out_kn.shape == (num_basis_functions, N)
    np.testing.assert_allclose(np.asarray(out_kn), ref.T, rtol=1e-4, atol=1e-5)

    # bf16 output + bf16 compute path (v6e/v7x bandwidth/compute saver) — loose check.
    out_bf16 = jax.block_until_ready(
        gaussian_rbf(r, num_basis_functions, cutoff,
                     out_dtype=jnp.bfloat16, compute_dtype=jnp.bfloat16))
    assert out_bf16.shape == (N, num_basis_functions)
    assert out_bf16.dtype == jnp.bfloat16
    np.testing.assert_allclose(np.asarray(out_bf16, dtype=np.float32), ref,
                               rtol=3e-2, atol=3e-2)

    print("KERNEL_OK")
</pallas_src>

<mosaic_0001>
module attributes {stable_mosaic.version = 11 : i64} {
  func.func @_gaussian_rbf_kernel(%arg0: i32, %arg1: memref<1x128xf32, #tpu.memory_space<vmem>>, %arg2: memref<16x128xf32, #tpu.memory_space<vmem>>) attributes {dimension_semantics = [#tpu.dimension_semantics<parallel>], iteration_bounds = array<i64: 2>, scalar_prefetch = 0 : i64, scratch_operands = 0 : i64, tpu.core_type = #tpu.core_type<tc>, window_params = [{transform_indices = @transform_0, window_bounds = array<i64: 1, 128>}, {transform_indices = @transform_1, window_bounds = array<i64: 16, 128>}]} {
    %c0 = arith.constant 0 : index
    %c0_0 = arith.constant 0 : index
    %0 = vector.load %arg1[%c0, %c0_0] : memref<1x128xf32, #tpu.memory_space<vmem>>, vector<1x128xf32>
    %cst = arith.constant 5.000000e+00 : f32
    %1 = vector.broadcast %cst : f32 to vector<1x128xf32>
    %2 = arith.cmpf olt, %0, %1 : vector<1x128xf32>
    %cst_1 = arith.constant 0.000000e+00 : f32
    %3 = vector.broadcast %cst_1 : f32 to vector<1x128xf32>
    %4 = arith.select %2, %0, %3 : vector<1x128xi1>, vector<1x128xf32>
    %5 = arith.mulf %4, %4 : vector<1x128xf32>
    %cst_2 = arith.constant 0.000000e+00 : f32
    %6 = vector.broadcast %cst_2 : f32 to vector<1x128xf32>
    %7 = arith.subf %6, %5 : vector<1x128xf32>
    %cst_3 = arith.constant 5.000000e+00 : f32
    %8 = vector.broadcast %cst_3 : f32 to vector<1x128xf32>
    %9 = arith.subf %8, %4 : vector<1x128xf32>
    %cst_4 = arith.constant 5.000000e+00 : f32
    %10 = vector.broadcast %cst_4 : f32 to vector<1x128xf32>
    %11 = arith.addf %10, %4 : vector<1x128xf32>
    %12 = arith.mulf %9, %11 : vector<1x128xf32>
    %13 = arith.divf %7, %12 : vector<1x128xf32>
    %cst_5 = arith.constant -1.000000e+30 : f32
    %14 = vector.broadcast %cst_5 : f32 to vector<1x128xf32>
    %15 = arith.select %2, %13, %14 : vector<1x128xi1>, vector<1x128xf32>
    %cst_6 = arith.constant 1.78885436 : f32
    %16 = vector.broadcast %cst_6 : f32 to vector<1x128xf32>
    %17 = arith.mulf %0, %16 : vector<1x128xf32>
    %18 = tpu.iota {dimensions = array<i32: 0>} : vector<16x1xi32>
    %19 = arith.sitofp %18 : vector<16x1xi32> to vector<16x1xf32>
    %cst_7 = arith.constant 0.596284807 : f32
    %20 = vector.broadcast %cst_7 : f32 to vector<16x1xf32>
    %21 = arith.mulf %19, %20 : vector<16x1xf32>
    %22 = vector.broadcast %17 : vector<1x128xf32> to vector<16x128xf32>
    %23 = vector.broadcast %21 : vector<16x1xf32> to vector<16x128xf32>
    %24 = arith.subf %22, %23 : vector<16x128xf32>
    %25 = arith.mulf %24, %24 : vector<16x128xf32>
    %26 = vector.broadcast %15 : vector<1x128xf32> to vector<16x128xf32>
    %27 = arith.subf %26, %25 : vector<16x128xf32>
    %28 = math.exp %27 : vector<16x128xf32>
    %c0_8 = arith.constant 0 : index
    %c0_9 = arith.constant 0 : index
    %29 = vector.load %arg2[%c0_8, %c0_9] : memref<16x128xf32, #tpu.memory_space<vmem>>, vector<16x128xf32>
    tpu.vector_store %arg2[%c0_8, %c0_9], %28 {strides = array<i32>} : memref<16x128xf32, #tpu.memory_space<vmem>>, vector<16x128xf32>,
    return
  }
  func.func @transform_0(%arg0: i32) -> (i32, i32) {
    %c0_i32 = arith.constant 0 : i32
    %c0_i32_0 = arith.constant 0 : i32
    return %c0_i32, %arg0 : i32, i32
  }
  func.func @transform_1(%arg0: i32) -> (i32, i32) {
    %c0_i32 = arith.constant 0 : i32
    %c0_i32_0 = arith.constant 0 : i32
    return %c0_i32, %arg0 : i32, i32
  }
}

</mosaic_0001>

<llo_original>
// kernel: tpu_custom_call.1
$region0: #{tpu_custom_call.1}
  #allocation0 [shape = 'u32[]', space=smem, size = 0x4, offset = 0x4, fixed_abs, tag = 'smem constant byte address 0x4 - core index']
  #allocation1 [shape = 'u32[72,128]{1,0:T(1,128)}', space=vmem, size = 0x9000, scoped, tag = 'internal scratch']
  %s0 = inlined_call_operand.hbm [shape: f32[1,256], index: 0, kind: input, shape index: {}]
  %s1 = inlined_call_operand.hbm [shape: f32[16,256], index: 1, kind: output, shape index: {}]
  %s2 = sld [smem:[#allocation0]]
  $region41: #{tpu_custom_call.1} parent=0
    _
  %s4 = ssub.s32 1, %s2
  %s5 = scalar_select 0, %s4, %s2
  $region1: #{tpu_custom_call.1} parent=0
    #allocation2 [shape = 'u8[1024]{0}', space=vmem, size = 0x400, scoped, tag = 'input window, operand 0']
    #allocation3 [shape = 's32[2]{0}', space=sflag, size = 0x8, scoped, tag = 'scoped memory for tpu_custom_call.1']
    #allocation4 [shape = 's32[2]{0}', space=sflag, size = 0x8, scoped, tag = 'scoped memory for tpu_custom_call.1']
    #allocation5 [shape = 'u8[16384]{0}', space=vmem, size = 0x4000, scoped, tag = 'output window, operand 0']
    %6 = vsyncpa [#allocation3], 0
    %s7 = scalar_lea.sflag [#allocation3], 1
    %8 = vsyncpa %s7, 0
    %9 = vsyncpa [#allocation4], 0
    %s10 = scalar_lea.sflag [#allocation4], 1
    %11 = vsyncpa %s10, 0
    loop: start=0, step=1, limit=4
    $region2: #{tpu_custom_call.1} parent=1 // loop_pre_header
      _
    $region3: #{tpu_custom_call.1} parent=1 // loop_header
      %s13 = sphi 0, %s17
      %p14 = scmp.ge.s32.totalorder %s13, 4
      %s23 = sphi 0, %s25
      %s26 = sphi 0, %s23
      %s27 = sphi 0, %s26
      %s43 = sphi 0, %s27
      %s49 = sphi 0, %s51
      %s52 = sphi 0, %s49
      %s53 = sphi 0, %s52
      %s69 = sphi 0, %s53
    $region4: #{tpu_custom_call.1} parent=1 // loop_header_branch
      %16 = sbr.rel (%p14) target = $region8
    $region5: #{tpu_custom_call.1} parent=1 // loop_body
      %s18 = ssub.s32 %s13, 1
      %s19 = ssub.s32 %s13, 2
      %s20 = sadd.s32 %s13, 1
      %s21 = ssub.s32 %s13, %s20
      %p22 = scmp.eq.s32.totalorder %s21, 0
      %s24 = sadd.s32 %s23, 1
      %s25 = scalar_select %p22, %s23, %s24
      %p28 = pneg %p22
      %p29 = scmp.eq.s32.totalorder %s13, 1
      %p30 = por %p28, %p29
      %p31 = scmp.ne.s32.totalorder %s23, %s26
      %p32 = scmp.eq.s32.totalorder %s13, 0
      %p33 = por %p31, %p32
      %p34 = scmp.ne.s32.totalorder %s23, %s26
      %p35 = scmp.eq.s32.totalorder %s18, 1
      %p36 = por %p34, %p35
      %p37 = scmp.ne.s32.totalorder %s26, %s27
      %p38 = scmp.eq.s32.totalorder %s18, 0
      %p39 = por %p37, %p38
      %p40 = scmp.ne.s32.totalorder %s26, %s27
      %p41 = scmp.eq.s32.totalorder %s19, 1
      %p42 = por %p40, %p41
      %p44 = scmp.ne.s32.totalorder %s27, %s43
      %p45 = scmp.eq.s32.totalorder %s19, 0
      %p46 = por %p44, %p45
      %s47 = ssub.s32 %s13, %s20
      %p48 = scmp.eq.s32.totalorder %s47, 0
      %s50 = sadd.s32 %s49, 1
      %s51 = scalar_select %p48, %s49, %s50
      %p54 = pneg %p48
      %p55 = scmp.eq.s32.totalorder %s13, 1
      %p56 = por %p54, %p55
      %p57 = scmp.ne.s32.totalorder %s49, %s52
      %p58 = scmp.eq.s32.totalorder %s13, 0
      %p59 = por %p57, %p58
      %p60 = scmp.ne.s32.totalorder %s49, %s52
      %p61 = scmp.eq.s32.totalorder %s18, 1
      %p62 = por %p60, %p61
      %p63 = scmp.ne.s32.totalorder %s52, %s53
      %p64 = scmp.eq.s32.totalorder %s18, 0
      %p65 = por %p63, %p64
      %p66 = scmp.ne.s32.totalorder %s52, %s53
      %p67 = scmp.eq.s32.totalorder %s19, 1
      %p68 = por %p66, %p67
      %p70 = scmp.ne.s32.totalorder %s53, %s69
      %p71 = scmp.eq.s32.totalorder %s19, 0
      %p72 = por %p70, %p71
      %p73 = scmp.le.s32.totalorder 1, %s13
      %p74 = scmp.lt.s32.totalorder %s13, 3
      %p75 = pnand %p73, %p74
      %p76 = pneg %p75
      // Predicated region
      $region9: #{tpu_custom_call.1} parent=5 // pred_check
        _
      $region10: #{tpu_custom_call.1} parent=5 // pred_check_branch
        %78 = sbr.rel (%p75) target = $region12
      $region11: #{tpu_custom_call.1} parent=5 // pred_region
        %s79 = ssub.s32 %s13, 1
      $region12: #{tpu_custom_call.1} parent=5 // pred_fallthru
        _
      %p80 = scmp.lt.s32.totalorder %s13, 2
      // Predicated region
      $region13: #{tpu_custom_call.1} parent=5 // pred_check
        %p81 = pneg %p80
      $region14: #{tpu_custom_call.1} parent=5 // pred_check_branch
        %83 = sbr.rel (%p81) target = $region16
      $region15: #{tpu_custom_call.1} parent=5 // pred_region
        // Predicated region
        $region17: #{tpu_custom_call.1} parent=15 // pred_check
          %p84 = pneg %p33
        $region18: #{tpu_custom_call.1} parent=15 // pred_check_branch
          %86 = sbr.rel (%p84) target = $region20
        $region19: #{tpu_custom_call.1} parent=15 // pred_region
          %s87 = sand.u32 %s23, 1
          %s88 = scalar_lea.sflag [#allocation3], %s87
          %s89 = sand.u32 %s23, 1
          %s90 = scalar_lea.vmem [#allocation2], %s89
          %92 = vsyncadd %s88, 0
          %s93 = scalar_lea.hbm %s0, %s13
          %s95 = sshll.u32 %s93, 4
          %s96 = int_to_ptr.hbm [resolvable:$true] %s95
          %s97 = sshll.u32 %s90, 4
          %s98 = int_to_ptr.vmem [resolvable:$true] %s97
          %100 = dma.hbm_to_vmem [thread:$0]  %s96, 16, %s98, %s88
        $region20: #{tpu_custom_call.1} parent=15 // pred_fallthru
          _
      $region16: #{tpu_custom_call.1} parent=5 // pred_fallthru
        _
      %p101 = scmp.le.s32.totalorder 1, %s13
      %p102 = scmp.lt.s32.totalorder %s13, 3
      %p103 = pnand %p101, %p102
      %p104 = pneg %p103
      // Predicated region
      $region21: #{tpu_custom_call.1} parent=5 // pred_check
        _
      $region22: #{tpu_custom_call.1} parent=5 // pred_check_branch
        %106 = sbr.rel (%p103) target = $region24
      $region23: #{tpu_custom_call.1} parent=5 // pred_region
        %s107 = ssub.s32 %s13, 1
        %s108 = sand.u32 %s26, 1
        %s109 = scalar_lea.sflag [#allocation3], %s108
        %s110 = sand.u32 %s26, 1
        %s111 = scalar_lea.vmem [#allocation2], %s110
        // Predicated region
        $region25: #{tpu_custom_call.1} parent=23 // pred_check
          %p112 = pneg %p39
        $region26: #{tpu_custom_call.1} parent=23 // pred_check_branch
          %114 = sbr.rel (%p112) target = $region28
        $region27: #{tpu_custom_call.1} parent=23 // pred_region
          %116 = dma.done %s109, 16
        $region28: #{tpu_custom_call.1} parent=23 // pred_fallthru
          _
        %s117 = sand.u32 %s26, 1
        %s118 = scalar_lea.sflag [#allocation3], %s117
        %s119 = sand.u32 %s26, 1
        %s120 = scalar_lea.vmem [#allocation2], %s119
        %p121 = pneg %p39
        %p122 = pneg %p36
        %p123 = pneg %p65
        %p124 = pneg %p62
        %s125 = sand.u32 %s52, 1
        %s126 = scalar_lea.sflag [#allocation4], %s125
        %s127 = sand.u32 %s52, 1
        %s128 = smul.addr %s127, 16
        %s129 = scalar_lea.vmem [#allocation5], %s128
        %v130 = vld [vmem:[%s111] sm:$0x1]
        %vm131 = vcmp.lt.f32.partialorder %v130, 5.0
        %v132 = vsel %vm131, %v130, 0.0
        %v133 = vmul.f32 %v132, %v132
        %v134 = vsub.f32 0.0, %v133
        %v135 = vsub.f32 5.0, %v132
        %v136 = vadd.f32 %v132, 5.0
        %v137 = vmul.f32 %v135, %v136
        %v138 = vrcp.pop %v137
        %v139 = vmul.f32 %v137, %v138
        %v140 = vsub.f32 1.0, %v139
        %v141 = vmul.f32 %v138, %v140
        %v142 = vadd.f32 %v138, %v141
        %vm143 = vweird.f32 %v137
        %vm144 = vweird.f32 %v138
        %vm145 = vmor %vm143, %vm144
        %v146 = vsel %vm145, %v138, %v142
        %v147 = vand.u32 2147483647, %v137
        %vm148 = vcmp.eq.f32.partialorder %v147, 8.507059e+37
        %v149 = vand.u32 %v137, 2147483648
        %v150 = vor.u32 1.1754944e-38, %v149
        %v151 = vsel %vm148, %v150, %v146
        %v152 = vmul.f32 %v134, %v151
        %v153 = vsel %vm131, %v152, -1e+30
        %v154 = vmul.f32 %v130, 1.7888544
        %v155 = vlaneseq
        %v156 = vshrl.u32 %v155, 7
        %v157 = vadd.s32 %v156, 8
        %v158 = vcvt.s32.f32 %v156
        %v159 = vcvt.s32.f32 %v157
        %v160 = vmul.f32 %v158, 0.5962848
        %v161 = vmul.f32 %v159, 0.5962848
        %v163 = vperm.slane %v154, 0
        %v165 = vsub.f32 %v163, %v160
        %v166 = vsub.f32 %v163, %v161
        %v167 = vmul.f32 %v165, %v165
        %v168 = vmul.f32 %v166, %v166
        %v170 = vperm.slane %v153, 0
        %v172 = vsub.f32 %v170, %v167
        %v173 = vsub.f32 %v170, %v168
        %v174 = vmul.f32 %v172, 1.442695
        %v175 = vpow.pop %v174
        %v176 = vmul.f32 %v173, 1.442695
        %v177 = vpow.pop %v176
        %178 = vst [vmem:[%s129] sm:$0xff] %v175
        %179 = vst [vmem:[%s129 + $0x8] sm:$0xff] %v177
        %s180 = sand.u32 %s52, 1
        %s181 = scalar_lea.sflag [#allocation4], %s180
        %s182 = sand.u32 %s52, 1
        %s183 = smul.addr %s182, 16
        %s184 = scalar_lea.vmem [#allocation5], %s183
        // Predicated region
        $region29: #{tpu_custom_call.1} parent=23 // pred_check
          %p185 = pneg %p62
        $region30: #{tpu_custom_call.1} parent=23 // pred_check_branch
          %187 = sbr.rel (%p185) target = $region32
        $region31: #{tpu_custom_call.1} parent=23 // pred_region
          %189 = vsyncadd %s181, 0
          %s190 = smul.addr %s18, 8
          %s191 = scalar_lea.hbm %s1, %s190
          %s192 = sshll.u32 %s184, 4
          %s193 = int_to_ptr.vmem [resolvable:$true] %s192
          %s194 = sshll.u32 %s191, 4
          %s195 = int_to_ptr.hbm [resolvable:$true] %s194
          %200 = dma.vmem_to_hbm [thread:$0]  %s193, 256, %s195, %s181, 128, 256, 8
        $region32: #{tpu_custom_call.1} parent=23 // pred_fallthru
          _
      $region24: #{tpu_custom_call.1} parent=5 // pred_fallthru
        _
      %p201 = scmp.le.s32.totalorder 2, %s13
      // Predicated region
      $region33: #{tpu_custom_call.1} parent=5 // pred_check
        %p202 = pneg %p201
      $region34: #{tpu_custom_call.1} parent=5 // pred_check_branch
        %204 = sbr.rel (%p202) target = $region36
      $region35: #{tpu_custom_call.1} parent=5 // pred_region
        %s205 = ssub.s32 %s13, 2
        // Predicated region
        $region37: #{tpu_custom_call.1} parent=35 // pred_check
          %p206 = pneg %p68
        $region38: #{tpu_custom_call.1} parent=35 // pred_check_branch
          %208 = sbr.rel (%p206) target = $region40
        $region39: #{tpu_custom_call.1} parent=35 // pred_region
          %s209 = sand.u32 %s53, 1
          %s210 = scalar_lea.sflag [#allocation4], %s209
          %s211 = sand.u32 %s53, 1
          %s212 = smul.addr %s211, 16
          %s213 = scalar_lea.vmem [#allocation5], %s212
          %215 = dma.done %s210, 256
        $region40: #{tpu_custom_call.1} parent=35 // pred_fallthru
          _
      $region36: #{tpu_custom_call.1} parent=5 // pred_fallthru
        _
    $region6: #{tpu_custom_call.1} parent=1 // loop_footer
      %s17 = sadd.s32 1, %s13
    $region7: #{tpu_custom_call.1} parent=1 // loop_footer_branch
      %12 = sbr.rel target = $region3
    $region8: #{tpu_custom_call.1} parent=1 // loop_exit
      _
    %216 = vsyncpa [#allocation3], 1
    %s217 = scalar_lea.sflag [#allocation3], 1
    %218 = vsyncpa %s217, 1
    %219 = vsyncpa [#allocation4], 1
    %s220 = scalar_lea.sflag [#allocation4], 1
    %221 = vsyncpa %s220, 1

</llo_original>
